<compile_context>
chip_gen: v7x
topology: tpu7x:2x2x1
jax: 0.10.0
libtpu: 0.0.40
codegen_flags: <defaults>
</compile_context>

<pallas_src>
import math

import jax
import jax.numpy as jnp
from jax.experimental import pallas as pl
from jax.experimental.pallas import tpu as pltpu


# ----------------------------------------------------------------------------
# Kernel
# ----------------------------------------------------------------------------
def extra_product_cell_kernel(
    x_ref,        # (B, tk)      bf16   matmul operand (K-tiled)
    h_ref,        # (B, tk)      bf16   matmul operand (K-tiled)
    wx_ref,       # (tk, 4*tn)   bf16   x-side weights, gate-interleaved per N tile
    wh_ref,       # (tk, 4*tn)   bf16   h-side weights
    bx_ref,       # (1, 4*tn)    f32    x-side biases
    bh_ref,       # (1, 4*tn)    f32    h-side biases
    hblend_ref,   # (B, tn)      f32    h for the final (1-z)*n + z*h blend (N-tiled)
    o_ref,        # (B, tn)      out
    accx_ref,     # (B, 4*tn)    f32 VMEM scratch accumulator (x side)
    acch_ref,     # (B, 4*tn)    f32 VMEM scratch accumulator (h side)
):
    k = pl.program_id(1)

    @pl.when(k == 0)
    def _init():
        accx_ref[...] = jnp.zeros_like(accx_ref)
        acch_ref[...] = jnp.zeros_like(acch_ref)

    # Two MXU dots per (n, k) step, accumulated in f32.
    accx_ref[...] += jnp.dot(x_ref[...], wx_ref[...],
                             preferred_element_type=jnp.float32)
    acch_ref[...] += jnp.dot(h_ref[...], wh_ref[...],
                             preferred_element_type=jnp.float32)

    @pl.when(k == pl.num_programs(1) - 1)
    def _finalize():
        tn = o_ref.shape[-1]
        # Bias added exactly once, after the K reduction.
        gx = accx_ref[...] + bx_ref[...]
        gh = acch_ref[...] + bh_ref[...]

        # 128-aligned lane slices: gate order per feature tile is [r, r2, z, n].
        r = jax.nn.sigmoid(gx[:, 0 * tn:1 * tn] + gh[:, 0 * tn:1 * tn])
        r2 = jax.nn.sigmoid(gx[:, 1 * tn:2 * tn] + gh[:, 1 * tn:2 * tn])
        z = jax.nn.sigmoid(gx[:, 2 * tn:3 * tn] + gh[:, 2 * tn:3 * tn])
        n = jnp.tanh(r2 * gx[:, 3 * tn:4 * tn] + r * gh[:, 3 * tn:4 * tn])

        hb = hblend_ref[...].astype(jnp.float32)
        o_ref[...] = ((1.0 - z) * n + z * hb).astype(o_ref.dtype)


# ----------------------------------------------------------------------------
# Packing helpers (gate-interleaved per feature tile of width tn)
# ----------------------------------------------------------------------------
_GATES = ("r", "r2", "z", "n")


def _pick_tile(D, candidates=(512, 256, 128)):
    for c in candidates:
        if D % c == 0:
            return c
    return D  # fallback for tiny / unaligned D (full-extent block)


def _pack_weight_cols(ws, tn):
    """ws: list of 4 (D_in, D_out) matrices in gate order [r, r2, z, n]."""
    d_in, d_out = ws[0].shape
    nt = d_out // tn
    stacked = jnp.stack([w.reshape(d_in, nt, tn) for w in ws], axis=2)  # (D, nt, 4, tn)
    return stacked.reshape(d_in, 4 * d_out)


def _pack_bias_cols(bs, tn):
    d = bs[0].shape[0]
    nt = d // tn
    stacked = jnp.stack([b.reshape(nt, tn) for b in bs], axis=1)  # (nt, 4, tn)
    return stacked.reshape(1, 4 * d)


# ----------------------------------------------------------------------------
# Wrapper
# ----------------------------------------------------------------------------
def extra_product_cell(x, h, params, *, tn=None, tk=None,
                       compute_dtype=jnp.bfloat16):
    """x, h: (B, D).  params: dict with W{g}{x,h} (D,D) in (in,out) layout, b{g}{x,h} (D,)."""
    B0, D = x.shape
    if tn is None:
        tn = _pick_tile(D)
    if tk is None:
        tk = _pick_tile(D)
    assert D % tn == 0 and D % tk == 0, "D must be divisible by the chosen tiles"
    nt_n, nt_k = D // tn, D // tk

    # Pad batch to a multiple of 8 (sublane alignment); un-pad after the call.
    B = max(8, ((B0 + 7) // 8) * 8)
    if B != B0:
        pad = ((0, B - B0), (0, 0))
        x = jnp.pad(x, pad)
        h = jnp.pad(h, pad)

    # Pack + narrow the weight stream (bf16 weights / activations, f32 biases).
    wx = _pack_weight_cols([params[f"W{g}x"] for g in _GATES], tn).astype(compute_dtype)
    wh = _pack_weight_cols([params[f"W{g}h"] for g in _GATES], tn).astype(compute_dtype)
    bx = _pack_bias_cols([params[f"b{g}x"] for g in _GATES], tn).astype(jnp.float32)
    bh = _pack_bias_cols([params[f"b{g}h"] for g in _GATES], tn).astype(jnp.float32)
    x_c = x.astype(compute_dtype)
    h_c = h.astype(compute_dtype)
    h_blend = h.astype(jnp.float32)

    # Advisory cost estimate for the XLA scheduler.
    flops = 2 * 2 * B * D * (4 * D)            # two (B,D)x(D,4D) matmuls
    transcendentals = 4 * B * D                # 3 sigmoids + 1 tanh per feature
    bpe_c = jnp.dtype(compute_dtype).itemsize
    bytes_accessed = int(
        (wx.size + wh.size) * bpe_c
        + (x_c.size + h_c.size) * bpe_c
        + (bx.size + bh.size) * 4
        + h_blend.size * 4
        + B * D * jnp.dtype(x.dtype).itemsize
    )

    # VMEM footprint (double-buffered inputs + resident output + accumulators).
    weight_blk = tk * 4 * tn * bpe_c
    act_blk = B * tk * bpe_c
    bias_blk = 4 * tn * 4
    out_blk = B * tn * jnp.dtype(x.dtype).itemsize
    hbl_blk = B * tn * 4
    acc_bytes = 2 * B * 4 * tn * 4
    vmem_est = 2 * (2 * weight_blk + 2 * act_blk + 2 * bias_blk + hbl_blk + out_blk) + acc_bytes
    # Cap below physical VMEM on the smallest target (v7x: 64 MiB per TC).
    vmem_limit = int(min(60 << 20, max(32 << 20, 2 * vmem_est)))

    out = pl.pallas_call(
        extra_product_cell_kernel,
        out_shape=jax.ShapeDtypeStruct((B, D), x.dtype),
        grid_spec=pltpu.PrefetchScalarGridSpec(
            num_scalar_prefetch=0,
            grid=(nt_n, nt_k),                                    # reduction axis last
            in_specs=[
                pl.BlockSpec((B, tk), lambda n, k: (0, k)),       # x (matmul)
                pl.BlockSpec((B, tk), lambda n, k: (0, k)),       # h (matmul)
                pl.BlockSpec((tk, 4 * tn), lambda n, k: (k, n)),  # Wx
                pl.BlockSpec((tk, 4 * tn), lambda n, k: (k, n)),  # Wh
                pl.BlockSpec((1, 4 * tn), lambda n, k: (0, n)),   # bx (no re-DMA over k)
                pl.BlockSpec((1, 4 * tn), lambda n, k: (0, n)),   # bh
                pl.BlockSpec((B, tn), lambda n, k: (0, n)),       # h (blend)
            ],
            out_specs=pl.BlockSpec((B, tn), lambda n, k: (0, n)),
            scratch_shapes=[
                pltpu.VMEM((B, 4 * tn), jnp.float32),
                pltpu.VMEM((B, 4 * tn), jnp.float32),
            ],
        ),
        compiler_params=pltpu.CompilerParams(
            dimension_semantics=("parallel", "arbitrary"),
            vmem_limit_bytes=vmem_limit,
        ),
        cost_estimate=pl.CostEstimate(
            flops=flops,
            transcendentals=transcendentals,
            bytes_accessed=bytes_accessed,
        ),
    )(x_c, h_c, wx, wh, bx, bh, h_blend)

    return out[:B0] if B != B0 else out


# ----------------------------------------------------------------------------
# Parameter init (matches nn.Linear's U(-1/sqrt(D), 1/sqrt(D)))
# ----------------------------------------------------------------------------
def init_params(key, D, dtype=jnp.float32):
    bound = 1.0 / math.sqrt(D)
    keys = jax.random.split(key, 16)
    params = {}
    i = 0
    for g in _GATES:
        for src in ("x", "h"):
            kw, kb = keys[i], keys[i + 1]
            i += 2
            W = jax.random.uniform(kw, (D, D), dtype, -bound, bound)  # torch (out, in)
            b = jax.random.uniform(kb, (D,), dtype, -bound, bound)
            params[f"W{g}{src}"] = W.T  # store (in, out) for x @ W
            params[f"b{g}{src}"] = b
    return params


# ----------------------------------------------------------------------------
# Pure-JAX reference (same bf16 matmul precision as the kernel, f32 elsewhere)
# ----------------------------------------------------------------------------
def extra_product_cell_ref(x, h, params, matmul_dtype=jnp.bfloat16):
    def lin(v, W, b):
        return jnp.dot(v.astype(matmul_dtype), W.astype(matmul_dtype),
                       preferred_element_type=jnp.float32) + b.astype(jnp.float32)

    r = jax.nn.sigmoid(lin(x, params["Wrx"], params["brx"]) +
                       lin(h, params["Wrh"], params["brh"]))
    r2 = jax.nn.sigmoid(lin(x, params["Wr2x"], params["br2x"]) +
                        lin(h, params["Wr2h"], params["br2h"]))
    z = jax.nn.sigmoid(lin(x, params["Wzx"], params["bzx"]) +
                       lin(h, params["Wzh"], params["bzh"]))
    n = jnp.tanh(r2 * lin(x, params["Wnx"], params["bnx"]) +
                 r * lin(h, params["Wnh"], params["bnh"]))
    return (1.0 - z) * n + z * h.astype(jnp.float32)


# ----------------------------------------------------------------------------
if __name__ == "__main__":
    B, D = 8, 256          # D multiple of 128 -> lane-dense gate tiles
    tn, tk = 128, 128      # small tiles so the test exercises a real (2, 2) grid

    key = jax.random.PRNGKey(0)
    kx, kh, kp = jax.random.split(key, 3)

    x = jax.random.normal(kx, (B, D), jnp.float32)
    h = jax.random.normal(kh, (B, D), jnp.float32)
    params = init_params(kp, D)

    out = extra_product_cell(x, h, params, tn=tn, tk=tk)
    out = jax.block_until_ready(out)

    ref = extra_product_cell_ref(x, h, params)
    assert out.shape == (B, D)
    assert jnp.allclose(out, ref, atol=2e-3, rtol=2e-3), (
        f"mismatch vs JAX reference: max abs err = {jnp.max(jnp.abs(out - ref))}")

    print("KERNEL_OK")
</pallas_src>

<mosaic_0001>
module attributes {stable_mosaic.version = 11 : i64} {
  func.func @extra_product_cell_kernel(%arg0: i32, %arg1: i32, %arg2: memref<8x128xbf16, #tpu.memory_space<vmem>>, %arg3: memref<8x128xbf16, #tpu.memory_space<vmem>>, %arg4: memref<128x512xbf16, #tpu.memory_space<vmem>>, %arg5: memref<128x512xbf16, #tpu.memory_space<vmem>>, %arg6: memref<1x512xf32, #tpu.memory_space<vmem>>, %arg7: memref<1x512xf32, #tpu.memory_space<vmem>>, %arg8: memref<8x128xf32, #tpu.memory_space<vmem>>, %arg9: memref<8x128xf32, #tpu.memory_space<vmem>>, %arg10: memref<8x512xf32, #tpu.memory_space<vmem>>, %arg11: memref<8x512xf32, #tpu.memory_space<vmem>>) attributes {dimension_semantics = [#tpu.dimension_semantics<parallel>, #tpu.dimension_semantics<arbitrary>], iteration_bounds = array<i64: 2, 2>, scalar_prefetch = 0 : i64, scratch_operands = 2 : i64, tpu.core_type = #tpu.core_type<tc>, window_params = [{transform_indices = @transform_0, window_bounds = array<i64: 8, 128>}, {transform_indices = @transform_1, window_bounds = array<i64: 8, 128>}, {transform_indices = @transform_2, window_bounds = array<i64: 128, 512>}, {transform_indices = @transform_3, window_bounds = array<i64: 128, 512>}, {transform_indices = @transform_4, window_bounds = array<i64: 1, 512>}, {transform_indices = @transform_5, window_bounds = array<i64: 1, 512>}, {transform_indices = @transform_6, window_bounds = array<i64: 8, 128>}, {transform_indices = @transform_7, window_bounds = array<i64: 8, 128>}]} {
    %c0_i32 = arith.constant 0 : i32
    %0 = arith.cmpi eq, %arg1, %c0_i32 : i32
    %1 = arith.extui %0 : i1 to i32
    %c0_i32_0 = arith.constant 0 : i32
    %2 = arith.cmpi ne, %1, %c0_i32_0 : i32
    scf.if %2 {
      %cst_18 = arith.constant 0.000000e+00 : f32
      %18 = vector.broadcast %cst_18 : f32 to vector<8x512xf32>
      %c0_19 = arith.constant 0 : index
      %c0_20 = arith.constant 0 : index
      %19 = vector.load %arg10[%c0_19, %c0_20] : memref<8x512xf32, #tpu.memory_space<vmem>>, vector<8x512xf32>
      tpu.vector_store %arg10[%c0_19, %c0_20], %18 {strides = array<i32>} : memref<8x512xf32, #tpu.memory_space<vmem>>, vector<8x512xf32>,
      %cst_21 = arith.constant 0.000000e+00 : f32
      %20 = vector.broadcast %cst_21 : f32 to vector<8x512xf32>
      %c0_22 = arith.constant 0 : index
      %c0_23 = arith.constant 0 : index
      %21 = vector.load %arg11[%c0_22, %c0_23] : memref<8x512xf32, #tpu.memory_space<vmem>>, vector<8x512xf32>
      tpu.vector_store %arg11[%c0_22, %c0_23], %20 {strides = array<i32>} : memref<8x512xf32, #tpu.memory_space<vmem>>, vector<8x512xf32>,
    } else {
    }
    %c0 = arith.constant 0 : index
    %c0_1 = arith.constant 0 : index
    %3 = vector.load %arg10[%c0, %c0_1] : memref<8x512xf32, #tpu.memory_space<vmem>>, vector<8x512xf32>
    %c0_2 = arith.constant 0 : index
    %c0_3 = arith.constant 0 : index
    %4 = vector.load %arg2[%c0_2, %c0_3] : memref<8x128xbf16, #tpu.memory_space<vmem>>, vector<8x128xbf16>
    %c0_4 = arith.constant 0 : index
    %c0_5 = arith.constant 0 : index
    %5 = vector.load %arg4[%c0_4, %c0_5] : memref<128x512xbf16, #tpu.memory_space<vmem>>, vector<128x512xbf16>
    %cst = arith.constant dense<0.000000e+00> : vector<8x512xf32>
    %6 = tpu.matmul %4, %5, %cst {dimension_numbers = #tpu.dot_dimension_numbers<[1], [0], [0], [1], [0, 0, 1, 1], [], []>} : vector<8x128xbf16>, vector<128x512xbf16>, vector<8x512xf32> -> vector<8x512xf32>
    %7 = arith.addf %3, %6 : vector<8x512xf32>
    %c0_6 = arith.constant 0 : index
    %c0_7 = arith.constant 0 : index
    %8 = vector.load %arg10[%c0_6, %c0_7] : memref<8x512xf32, #tpu.memory_space<vmem>>, vector<8x512xf32>
    tpu.vector_store %arg10[%c0_6, %c0_7], %7 {strides = array<i32>} : memref<8x512xf32, #tpu.memory_space<vmem>>, vector<8x512xf32>,
    %c0_8 = arith.constant 0 : index
    %c0_9 = arith.constant 0 : index
    %9 = vector.load %arg11[%c0_8, %c0_9] : memref<8x512xf32, #tpu.memory_space<vmem>>, vector<8x512xf32>
    %c0_10 = arith.constant 0 : index
    %c0_11 = arith.constant 0 : index
    %10 = vector.load %arg3[%c0_10, %c0_11] : memref<8x128xbf16, #tpu.memory_space<vmem>>, vector<8x128xbf16>
    %c0_12 = arith.constant 0 : index
    %c0_13 = arith.constant 0 : index
    %11 = vector.load %arg5[%c0_12, %c0_13] : memref<128x512xbf16, #tpu.memory_space<vmem>>, vector<128x512xbf16>
    %cst_14 = arith.constant dense<0.000000e+00> : vector<8x512xf32>
    %12 = tpu.matmul %10, %11, %cst_14 {dimension_numbers = #tpu.dot_dimension_numbers<[1], [0], [0], [1], [0, 0, 1, 1], [], []>} : vector<8x128xbf16>, vector<128x512xbf16>, vector<8x512xf32> -> vector<8x512xf32>
    %13 = arith.addf %9, %12 : vector<8x512xf32>
    %c0_15 = arith.constant 0 : index
    %c0_16 = arith.constant 0 : index
    %14 = vector.load %arg11[%c0_15, %c0_16] : memref<8x512xf32, #tpu.memory_space<vmem>>, vector<8x512xf32>
    tpu.vector_store %arg11[%c0_15, %c0_16], %13 {strides = array<i32>} : memref<8x512xf32, #tpu.memory_space<vmem>>, vector<8x512xf32>,
    %c1_i32 = arith.constant 1 : i32
    %15 = arith.cmpi eq, %arg1, %c1_i32 : i32
    %16 = arith.extui %15 : i1 to i32
    %c0_i32_17 = arith.constant 0 : i32
    %17 = arith.cmpi ne, %16, %c0_i32_17 : i32
    scf.if %17 {
      %c0_18 = arith.constant 0 : index
      %c0_19 = arith.constant 0 : index
      %18 = vector.load %arg10[%c0_18, %c0_19] : memref<8x512xf32, #tpu.memory_space<vmem>>, vector<8x512xf32>
      %c0_20 = arith.constant 0 : index
      %c0_21 = arith.constant 0 : index
      %19 = vector.load %arg6[%c0_20, %c0_21] : memref<1x512xf32, #tpu.memory_space<vmem>>, vector<1x512xf32>
      %20 = vector.broadcast %19 : vector<1x512xf32> to vector<8x512xf32>
      %21 = arith.addf %18, %20 : vector<8x512xf32>
      %c0_22 = arith.constant 0 : index
      %c0_23 = arith.constant 0 : index
      %22 = vector.load %arg11[%c0_22, %c0_23] : memref<8x512xf32, #tpu.memory_space<vmem>>, vector<8x512xf32>
      %c0_24 = arith.constant 0 : index
      %c0_25 = arith.constant 0 : index
      %23 = vector.load %arg7[%c0_24, %c0_25] : memref<1x512xf32, #tpu.memory_space<vmem>>, vector<1x512xf32>
      %24 = vector.broadcast %23 : vector<1x512xf32> to vector<8x512xf32>
      %25 = arith.addf %22, %24 : vector<8x512xf32>
      %26 = vector.extract_strided_slice %21 {offsets = [0, 0], sizes = [8, 128], strides = [1, 1]} : vector<8x512xf32> to vector<8x128xf32>
      %27 = vector.extract_strided_slice %25 {offsets = [0, 0], sizes = [8, 128], strides = [1, 1]} : vector<8x512xf32> to vector<8x128xf32>
      %28 = arith.addf %26, %27 : vector<8x128xf32>
      %29 = arith.negf %28 : vector<8x128xf32>
      %30 = math.exp %29 : vector<8x128xf32>
      %cst_26 = arith.constant 1.000000e+00 : f32
      %31 = vector.broadcast %cst_26 : f32 to vector<8x128xf32>
      %32 = arith.addf %31, %30 : vector<8x128xf32>
      %33 = arith.divf %31, %32 : vector<8x128xf32>
      %34 = vector.extract_strided_slice %21 {offsets = [0, 128], sizes = [8, 128], strides = [1, 1]} : vector<8x512xf32> to vector<8x128xf32>
      %35 = vector.extract_strided_slice %25 {offsets = [0, 128], sizes = [8, 128], strides = [1, 1]} : vector<8x512xf32> to vector<8x128xf32>
      %36 = arith.addf %34, %35 : vector<8x128xf32>
      %37 = arith.negf %36 : vector<8x128xf32>
      %38 = math.exp %37 : vector<8x128xf32>
      %cst_27 = arith.constant 1.000000e+00 : f32
      %39 = vector.broadcast %cst_27 : f32 to vector<8x128xf32>
      %40 = arith.addf %39, %38 : vector<8x128xf32>
      %41 = arith.divf %39, %40 : vector<8x128xf32>
      %42 = vector.extract_strided_slice %21 {offsets = [0, 256], sizes = [8, 128], strides = [1, 1]} : vector<8x512xf32> to vector<8x128xf32>
      %43 = vector.extract_strided_slice %25 {offsets = [0, 256], sizes = [8, 128], strides = [1, 1]} : vector<8x512xf32> to vector<8x128xf32>
      %44 = arith.addf %42, %43 : vector<8x128xf32>
      %45 = arith.negf %44 : vector<8x128xf32>
      %46 = math.exp %45 : vector<8x128xf32>
      %cst_28 = arith.constant 1.000000e+00 : f32
      %47 = vector.broadcast %cst_28 : f32 to vector<8x128xf32>
      %48 = arith.addf %47, %46 : vector<8x128xf32>
      %49 = arith.divf %47, %48 : vector<8x128xf32>
      %50 = vector.extract_strided_slice %21 {offsets = [0, 384], sizes = [8, 128], strides = [1, 1]} : vector<8x512xf32> to vector<8x128xf32>
      %51 = arith.mulf %41, %50 : vector<8x128xf32>
      %52 = vector.extract_strided_slice %25 {offsets = [0, 384], sizes = [8, 128], strides = [1, 1]} : vector<8x512xf32> to vector<8x128xf32>
      %53 = arith.mulf %33, %52 : vector<8x128xf32>
      %54 = arith.addf %51, %53 : vector<8x128xf32>
      %55 = math.tanh %54 : vector<8x128xf32>
      %c0_29 = arith.constant 0 : index
      %c0_30 = arith.constant 0 : index
      %56 = vector.load %arg8[%c0_29, %c0_30] : memref<8x128xf32, #tpu.memory_space<vmem>>, vector<8x128xf32>
      %cst_31 = arith.constant 1.000000e+00 : f32
      %57 = vector.broadcast %cst_31 : f32 to vector<8x128xf32>
      %58 = arith.subf %57, %49 : vector<8x128xf32>
      %59 = arith.mulf %58, %55 : vector<8x128xf32>
      %60 = arith.mulf %49, %56 : vector<8x128xf32>
      %61 = arith.addf %59, %60 : vector<8x128xf32>
      %c0_32 = arith.constant 0 : index
      %c0_33 = arith.constant 0 : index
      %62 = vector.load %arg9[%c0_32, %c0_33] : memref<8x128xf32, #tpu.memory_space<vmem>>, vector<8x128xf32>
      tpu.vector_store %arg9[%c0_32, %c0_33], %61 {strides = array<i32>} : memref<8x128xf32, #tpu.memory_space<vmem>>, vector<8x128xf32>,
    } else {
    }
    return
  }
  func.func @transform_0(%arg0: i32, %arg1: i32) -> (i32, i32) {
    %c0_i32 = arith.constant 0 : i32
    %c0_i32_0 = arith.constant 0 : i32
    return %c0_i32, %arg1 : i32, i32
  }
  func.func @transform_1(%arg0: i32, %arg1: i32) -> (i32, i32) {
    %c0_i32 = arith.constant 0 : i32
    %c0_i32_0 = arith.constant 0 : i32
    return %c0_i32, %arg1 : i32, i32
  }
  func.func @transform_2(%arg0: i32, %arg1: i32) -> (i32, i32) {
    %c0_i32 = arith.constant 0 : i32
    return %arg1, %arg0 : i32, i32
  }
  func.func @transform_3(%arg0: i32, %arg1: i32) -> (i32, i32) {
    %c0_i32 = arith.constant 0 : i32
    return %arg1, %arg0 : i32, i32
  }
  func.func @transform_4(%arg0: i32, %arg1: i32) -> (i32, i32) {
    %c0_i32 = arith.constant 0 : i32
    %c0_i32_0 = arith.constant 0 : i32
    return %c0_i32, %arg0 : i32, i32
  }
  func.func @transform_5(%arg0: i32, %arg1: i32) -> (i32, i32) {
    %c0_i32 = arith.constant 0 : i32
    %c0_i32_0 = arith.constant 0 : i32
    return %c0_i32, %arg0 : i32, i32
  }
  func.func @transform_6(%arg0: i32, %arg1: i32) -> (i32, i32) {
    %c0_i32 = arith.constant 0 : i32
    %c0_i32_0 = arith.constant 0 : i32
    return %c0_i32, %arg0 : i32, i32
  }
  func.func @transform_7(%arg0: i32, %arg1: i32) -> (i32, i32) {
    %c0_i32 = arith.constant 0 : i32
    %c0_i32_0 = arith.constant 0 : i32
    return %c0_i32, %arg0 : i32, i32
  }
}

</mosaic_0001>

<llo_original>
// kernel: tpu_custom_call.1
$region0: #{tpu_custom_call.1}
  #allocation0 [shape = 'u32[]', space=smem, size = 0x4, offset = 0x4, fixed_abs, tag = 'smem constant byte address 0x4 - core index']
  #allocation1 [shape = 'u32[144,128]{1,0:T(1,128)}', space=vmem, size = 0x12000, scoped, tag = 'internal scratch']
  #allocation2 [shape = 'f32[8,512]{1,0:T(8,128)}', space=vmem, size = 0x4000, scoped, tag = 'scratch operand']
  #allocation3 [shape = 'f32[8,512]{1,0:T(8,128)}', space=vmem, size = 0x4000, scoped, tag = 'scratch operand']
  %s0 = inlined_call_operand.hbm [shape: bf16[8,256], index: 0, kind: input, shape index: {}]
  %s1 = inlined_call_operand.hbm [shape: bf16[8,256], index: 1, kind: input, shape index: {}]
  %s2 = inlined_call_operand.hbm [shape: bf16[256,1024], index: 2, kind: input, shape index: {}]
  %s3 = inlined_call_operand.hbm [shape: bf16[256,1024], index: 3, kind: input, shape index: {}]
  %s4 = inlined_call_operand.hbm [shape: f32[1,1024], index: 4, kind: input, shape index: {}]
  %s5 = inlined_call_operand.hbm [shape: f32[1,1024], index: 5, kind: input, shape index: {}]
  %s6 = inlined_call_operand.vmem [shape: f32[8,256], index: 6, kind: input, shape index: {}]
  %s7 = inlined_call_operand.hbm [shape: f32[8,256], index: 7, kind: output, shape index: {}]
  %s8 = sld [smem:[#allocation0]]
  $region93: #{tpu_custom_call.1} parent=0
    _
  %s10 = ssub.s32 1, %s8
  %s11 = scalar_select 0, %s10, %s8
  $region1: #{tpu_custom_call.1} parent=0
    #allocation4 [shape = 'u8[4096]{0}', space=vmem, size = 0x1000, scoped, tag = 'input window, operand 0']
    #allocation5 [shape = 's32[2]{0}', space=sflag, size = 0x8, scoped, tag = 'scoped memory for tpu_custom_call.1']
    #allocation6 [shape = 's32[2]{0}', space=sflag, size = 0x8, scoped, tag = 'scoped memory for tpu_custom_call.1']
    #allocation7 [shape = 'u8[4096]{0}', space=vmem, size = 0x1000, scoped, tag = 'input window, operand 1']
    #allocation8 [shape = 's32[2]{0}', space=sflag, size = 0x8, scoped, tag = 'scoped memory for tpu_custom_call.1']
    #allocation9 [shape = 'u8[262144]{0}', space=vmem, size = 0x40000, scoped, tag = 'input window, operand 2']
    #allocation10 [shape = 'u8[262144]{0}', space=vmem, size = 0x40000, scoped, tag = 'input window, operand 3']
    #allocation11 [shape = 's32[2]{0}', space=sflag, size = 0x8, scoped, tag = 'scoped memory for tpu_custom_call.1']
    #allocation12 [shape = 'u8[4096]{0}', space=vmem, size = 0x1000, scoped, tag = 'input window, operand 4']
    #allocation13 [shape = 'u8[4096]{0}', space=vmem, size = 0x1000, scoped, tag = 'input window, operand 5']
    #allocation14 [shape = 's32[2]{0}', space=sflag, size = 0x8, scoped, tag = 'scoped memory for tpu_custom_call.1']
    #allocation15 [shape = 'u8[8192]{0}', space=vmem, size = 0x2000, scoped, tag = 'output window, operand 0']
    %12 = vsyncpa [#allocation5], 0
    %s13 = scalar_lea.sflag [#allocation5], 1
    %14 = vsyncpa %s13, 0
    %15 = vsyncpa [#allocation8], 0
    %s16 = scalar_lea.sflag [#allocation8], 1
    %17 = vsyncpa %s16, 0
    %18 = vsyncpa [#allocation11], 0
    %s19 = scalar_lea.sflag [#allocation11], 1
    %20 = vsyncpa %s19, 0
    %21 = vsyncpa [#allocation14], 0
    %s22 = scalar_lea.sflag [#allocation14], 1
    %23 = vsyncpa %s22, 0
    %24 = vsyncpa [#allocation6], 0
    %s25 = scalar_lea.sflag [#allocation6], 1
    %26 = vsyncpa %s25, 0
    loop: start=0, step=1, limit=6
    $region2: #{tpu_custom_call.1} parent=1 // loop_pre_header
      _
    $region3: #{tpu_custom_call.1} parent=1 // loop_header
      %s28 = sphi 0, %s32
      %p29 = scmp.ge.s32.totalorder %s28, 6
      %s35 = sphi 0, %s47
      %s36 = sphi 0, %s43
      %s37 = sphi 0, %s35
      %s38 = sphi 0, %s36
      %s39 = sphi 0, %s37
      %s40 = sphi 0, %s38
      %s50 = sphi 0, %s52
      %s53 = sphi 0, %s50
      %s54 = sphi 0, %s53
      %s70 = sphi 0, %s54
      %s76 = sphi 0, %s78
      %s79 = sphi 0, %s76
      %s80 = sphi 0, %s79
      %s96 = sphi 0, %s80
      %s104 = sphi 0, %s106
      %s107 = sphi 0, %s104
      %s108 = sphi 0, %s107
      %s124 = sphi 0, %s108
      %s132 = sphi 0, %s134
      %s135 = sphi 0, %s132
      %s136 = sphi 0, %s135
      %s152 = sphi 0, %s136
      %s158 = sphi 0, %s160
      %s161 = sphi 0, %s158
      %s162 = sphi 0, %s161
      %s178 = sphi 0, %s162
      %s184 = sphi 0, %s186
      %s187 = sphi 0, %s184
      %s188 = sphi 0, %s187
      %s204 = sphi 0, %s188
      %s210 = sphi 0, %s212
      %s213 = sphi 0, %s210
      %s214 = sphi 0, %s213
      %s230 = sphi 0, %s214
      %s236 = sphi 0, %s238
      %s239 = sphi 0, %s236
      %s240 = sphi 0, %s239
      %s256 = sphi 0, %s240
    $region4: #{tpu_custom_call.1} parent=1 // loop_header_branch
      %31 = sbr.rel (%p29) target = $region8
    $region5: #{tpu_custom_call.1} parent=1 // loop_body
      %s33 = ssub.s32 %s28, 1
      %s34 = ssub.s32 %s28, 2
      %s41 = sadd.s32 1, %s36
      %p42 = scmp.ge.s32.totalorder %s41, 2
      %s43 = scalar_select %p42, 0, %s41
      %s44 = sadd.s32 1, %s35
      %s45 = scalar_select %p42, %s44, %s35
      %p46 = scmp.ge.s32.totalorder %s45, 2
      %s47 = scalar_select %p46, 0, %s45
      %s48 = ssub.s32 %s36, %s43
      %p49 = scmp.eq.s32.totalorder %s48, 0
      %s51 = sadd.s32 %s50, 1
      %s52 = scalar_select %p49, %s50, %s51
      %p55 = pneg %p49
      %p56 = scmp.eq.s32.totalorder %s28, 3
      %p57 = por %p55, %p56
      %p58 = scmp.ne.s32.totalorder %s50, %s53
      %p59 = scmp.eq.s32.totalorder %s28, 0
      %p60 = por %p58, %p59
      %p61 = scmp.ne.s32.totalorder %s50, %s53
      %p62 = scmp.eq.s32.totalorder %s33, 3
      %p63 = por %p61, %p62
      %p64 = scmp.ne.s32.totalorder %s53, %s54
      %p65 = scmp.eq.s32.totalorder %s33, 0
      %p66 = por %p64, %p65
      %p67 = scmp.ne.s32.totalorder %s53, %s54
      %p68 = scmp.eq.s32.totalorder %s34, 3
      %p69 = por %p67, %p68
      %p71 = scmp.ne.s32.totalorder %s54, %s70
      %p72 = scmp.eq.s32.totalorder %s34, 0
      %p73 = por %p71, %p72
      %s74 = ssub.s32 %s36, %s43
      %p75 = scmp.eq.s32.totalorder %s74, 0
      %s77 = sadd.s32 %s76, 1
      %s78 = scalar_select %p75, %s76, %s77
      %p81 = pneg %p75
      %p82 = scmp.eq.s32.totalorder %s28, 3
      %p83 = por %p81, %p82
      %p84 = scmp.ne.s32.totalorder %s76, %s79
      %p85 = scmp.eq.s32.totalorder %s28, 0
      %p86 = por %p84, %p85
      %p87 = scmp.ne.s32.totalorder %s76, %s79
      %p88 = scmp.eq.s32.totalorder %s33, 3
      %p89 = por %p87, %p88
      %p90 = scmp.ne.s32.totalorder %s79, %s80
      %p91 = scmp.eq.s32.totalorder %s33, 0
      %p92 = por %p90, %p91
      %p93 = scmp.ne.s32.totalorder %s79, %s80
      %p94 = scmp.eq.s32.totalorder %s34, 3
      %p95 = por %p93, %p94
      %p97 = scmp.ne.s32.totalorder %s80, %s96
      %p98 = scmp.eq.s32.totalorder %s34, 0
      %p99 = por %p97, %p98
      %s100 = ssub.s32 %s36, %s43
      %s101 = ssub.s32 %s35, %s47
      %s102 = sor.u32 %s100, %s101
      %p103 = scmp.eq.s32.totalorder %s102, 0
      %s105 = sadd.s32 %s104, 1
      %s106 = scalar_select %p103, %s104, %s105
      %p109 = pneg %p103
      %p110 = scmp.eq.s32.totalorder %s28, 3
      %p111 = por %p109, %p110
      %p112 = scmp.ne.s32.totalorder %s104, %s107
      %p113 = scmp.eq.s32.totalorder %s28, 0
      %p114 = por %p112, %p113
      %p115 = scmp.ne.s32.totalorder %s104, %s107
      %p116 = scmp.eq.s32.totalorder %s33, 3
      %p117 = por %p115, %p116
      %p118 = scmp.ne.s32.totalorder %s107, %s108
      %p119 = scmp.eq.s32.totalorder %s33, 0
      %p120 = por %p118, %p119
      %p121 = scmp.ne.s32.totalorder %s107, %s108
      %p122 = scmp.eq.s32.totalorder %s34, 3
      %p123 = por %p121, %p122
      %p125 = scmp.ne.s32.totalorder %s108, %s124
      %p126 = scmp.eq.s32.totalorder %s34, 0
      %p127 = por %p125, %p126
      %s128 = ssub.s32 %s36, %s43
      %s129 = ssub.s32 %s35, %s47
      %s130 = sor.u32 %s128, %s129
      %p131 = scmp.eq.s32.totalorder %s130, 0
      %s133 = sadd.s32 %s132, 1
      %s134 = scalar_select %p131, %s132, %s133
      %p137 = pneg %p131
      %p138 = scmp.eq.s32.totalorder %s28, 3
      %p139 = por %p137, %p138
      %p140 = scmp.ne.s32.totalorder %s132, %s135
      %p141 = scmp.eq.s32.totalorder %s28, 0
      %p142 = por %p140, %p141
      %p143 = scmp.ne.s32.totalorder %s132, %s135
      %p144 = scmp.eq.s32.totalorder %s33, 3
      %p145 = por %p143, %p144
      %p146 = scmp.ne.s32.totalorder %s135, %s136
      %p147 = scmp.eq.s32.totalorder %s33, 0
      %p148 = por %p146, %p147
      %p149 = scmp.ne.s32.totalorder %s135, %s136
      %p150 = scmp.eq.s32.totalorder %s34, 3
      %p151 = por %p149, %p150
      %p153 = scmp.ne.s32.totalorder %s136, %s152
      %p154 = scmp.eq.s32.totalorder %s34, 0
      %p155 = por %p153, %p154
      %s156 = ssub.s32 %s35, %s47
      %p157 = scmp.eq.s32.totalorder %s156, 0
      %s159 = sadd.s32 %s158, 1
      %s160 = scalar_select %p157, %s158, %s159
      %p163 = pneg %p157
      %p164 = scmp.eq.s32.totalorder %s28, 3
      %p165 = por %p163, %p164
      %p166 = scmp.ne.s32.totalorder %s158, %s161
      %p167 = scmp.eq.s32.totalorder %s28, 0
      %p168 = por %p166, %p167
      %p169 = scmp.ne.s32.totalorder %s158, %s161
      %p170 = scmp.eq.s32.totalorder %s33, 3
      %p171 = por %p169, %p170
      %p172 = scmp.ne.s32.totalorder %s161, %s162
      %p173 = scmp.eq.s32.totalorder %s33, 0
      %p174 = por %p172, %p173
      %p175 = scmp.ne.s32.totalorder %s161, %s162
      %p176 = scmp.eq.s32.totalorder %s34, 3
      %p177 = por %p175, %p176
      %p179 = scmp.ne.s32.totalorder %s162, %s178
      %p180 = scmp.eq.s32.totalorder %s34, 0
      %p181 = por %p179, %p180
      %s182 = ssub.s32 %s35, %s47
      %p183 = scmp.eq.s32.totalorder %s182, 0
      %s185 = sadd.s32 %s184, 1
      %s186 = scalar_select %p183, %s184, %s185
      %p189 = pneg %p183
      %p190 = scmp.eq.s32.totalorder %s28, 3
      %p191 = por %p189, %p190
      %p192 = scmp.ne.s32.totalorder %s184, %s187
      %p193 = scmp.eq.s32.totalorder %s28, 0
      %p194 = por %p192, %p193
      %p195 = scmp.ne.s32.totalorder %s184, %s187
      %p196 = scmp.eq.s32.totalorder %s33, 3
      %p197 = por %p195, %p196
      %p198 = scmp.ne.s32.totalorder %s187, %s188
      %p199 = scmp.eq.s32.totalorder %s33, 0
      %p200 = por %p198, %p199
      %p201 = scmp.ne.s32.totalorder %s187, %s188
      %p202 = scmp.eq.s32.totalorder %s34, 3
      %p203 = por %p201, %p202
      %p205 = scmp.ne.s32.totalorder %s188, %s204
      %p206 = scmp.eq.s32.totalorder %s34, 0
      %p207 = por %p205, %p206
      %s208 = ssub.s32 %s35, %s47
      %p209 = scmp.eq.s32.totalorder %s208, 0
      %s211 = sadd.s32 %s210, 1
      %s212 = scalar_select %p209, %s210, %s211
      %p215 = pneg %p209
      %p216 = scmp.eq.s32.totalorder %s28, 3
      %p217 = por %p215, %p216
      %p218 = scmp.ne.s32.totalorder %s210, %s213
      %p219 = scmp.eq.s32.totalorder %s28, 0
      %p220 = por %p218, %p219
      %p221 = scmp.ne.s32.totalorder %s210, %s213
      %p222 = scmp.eq.s32.totalorder %s33, 3
      %p223 = por %p221, %p222
      %p224 = scmp.ne.s32.totalorder %s213, %s214
      %p225 = scmp.eq.s32.totalorder %s33, 0
      %p226 = por %p224, %p225
      %p227 = scmp.ne.s32.totalorder %s213, %s214
      %p228 = scmp.eq.s32.totalorder %s34, 3
      %p229 = por %p227, %p228
      %p231 = scmp.ne.s32.totalorder %s214, %s230
      %p232 = scmp.eq.s32.totalorder %s34, 0
      %p233 = por %p231, %p232
      %s234 = ssub.s32 %s35, %s47
      %p235 = scmp.eq.s32.totalorder %s234, 0
      %s237 = sadd.s32 %s236, 1
      %s238 = scalar_select %p235, %s236, %s237
      %p241 = pneg %p235
      %p242 = scmp.eq.s32.totalorder %s28, 3
      %p243 = por %p241, %p242
      %p244 = scmp.ne.s32.totalorder %s236, %s239
      %p245 = scmp.eq.s32.totalorder %s28, 0
      %p246 = por %p244, %p245
      %p247 = scmp.ne.s32.totalorder %s236, %s239
      %p248 = scmp.eq.s32.totalorder %s33, 3
      %p249 = por %p247, %p248
      %p250 = scmp.ne.s32.totalorder %s239, %s240
      %p251 = scmp.eq.s32.totalorder %s33, 0
      %p252 = por %p250, %p251
      %p253 = scmp.ne.s32.totalorder %s239, %s240
      %p254 = scmp.eq.s32.totalorder %s34, 3
      %p255 = por %p253, %p254
      %p257 = scmp.ne.s32.totalorder %s240, %s256
      %p258 = scmp.eq.s32.totalorder %s34, 0
      %p259 = por %p257, %p258
      %p260 = scmp.le.s32.totalorder 1, %s28
      %p261 = scmp.lt.s32.totalorder %s28, 5
      %p262 = pnand %p260, %p261
      %p263 = pneg %p262
      // Predicated region
      $region9: #{tpu_custom_call.1} parent=5 // pred_check
        _
      $region10: #{tpu_custom_call.1} parent=5 // pred_check_branch
        %265 = sbr.rel (%p262) target = $region12
      $region11: #{tpu_custom_call.1} parent=5 // pred_region
        %s266 = ssub.s32 %s28, 1
      $region12: #{tpu_custom_call.1} parent=5 // pred_fallthru
        _
      %p267 = scmp.lt.s32.totalorder %s28, 4
      // Predicated region
      $region13: #{tpu_custom_call.1} parent=5 // pred_check
        %p268 = pneg %p267
      $region14: #{tpu_custom_call.1} parent=5 // pred_check_branch
        %270 = sbr.rel (%p268) target = $region16
      $region15: #{tpu_custom_call.1} parent=5 // pred_region
        // Predicated region
        $region17: #{tpu_custom_call.1} parent=15 // pred_check
          %p271 = pneg %p60
        $region18: #{tpu_custom_call.1} parent=15 // pred_check_branch
          %273 = sbr.rel (%p271) target = $region20
        $region19: #{tpu_custom_call.1} parent=15 // pred_region
          %s274 = sand.u32 %s50, 1
          %s275 = scalar_lea.sflag [#allocation5], %s274
          %s276 = sand.u32 %s50, 1
          %s277 = smul.addr %s276, 4
          %s278 = scalar_lea.vmem [#allocation4], %s277
          %s280 = ssub.s32 64, 64
          %281 = vsyncadd %s275, %s280
          %s282 = smul.addr %s36, 64
          %s283 = scalar_lea.hbm %s0, %s282
          %s285 = sshll.u32 %s278, 4
          %s286 = int_to_ptr.vmem [resolvable:$true] %s285
          %288 = dma.hbm_to_vmem [thread:$0]  %s283, 64, %s286, %s275
        $region20: #{tpu_custom_call.1} parent=15 // pred_fallthru
          _
        // Predicated region
        $region21: #{tpu_custom_call.1} parent=15 // pred_check
          %p289 = pneg %p86
        $region22: #{tpu_custom_call.1} parent=15 // pred_check_branch
          %291 = sbr.rel (%p289) target = $region24
        $region23: #{tpu_custom_call.1} parent=15 // pred_region
          %s292 = sand.u32 %s28, 1
          %s293 = scalar_lea.sflag [#allocation8], %s292
          %s294 = sand.u32 %s76, 1
          %s295 = smul.addr %s294, 4
          %s296 = scalar_lea.vmem [#allocation7], %s295
          %s298 = ssub.s32 64, 64
          %299 = vsyncadd %s293, %s298
          %s300 = smul.addr %s36, 64
          %s301 = scalar_lea.hbm %s1, %s300
          %s303 = sshll.u32 %s296, 4
          %s304 = int_to_ptr.vmem [resolvable:$true] %s303
          %306 = dma.hbm_to_vmem [thread:$0]  %s301, 64, %s304, %s293
        $region24: #{tpu_custom_call.1} parent=15 // pred_fallthru
          _
        // Predicated region
        $region25: #{tpu_custom_call.1} parent=15 // pred_check
          %p307 = pneg %p114
        $region26: #{tpu_custom_call.1} parent=15 // pred_check_branch
          %309 = sbr.rel (%p307) target = $region28
        $region27: #{tpu_custom_call.1} parent=15 // pred_region
          %s310 = sand.u32 %s28, 1
          %s311 = scalar_lea.sflag [#allocation8], %s310
          %s312 = sand.u32 %s104, 1
          %s313 = smul.addr %s312, 256
          %s314 = scalar_lea.vmem [#allocation9], %s313
          %s315 = smul.u32 16, %s36
          %s316 = smul.u32 4, %s35
          %s318 = ssub.s32 4096, 4096
          %319 = vsyncadd %s311, %s318
          %s320 = smul.addr %s315, 8
          %s321 = sadd.s32 %s316, %s320
          %s322 = smul.addr %s321, 64
          %s323 = scalar_lea.hbm %s2, %s322
          %s324 = sshll.u32 %s314, 4
          %s325 = int_to_ptr.vmem [resolvable:$true] %s324
          %330 = dma.hbm_to_vmem [thread:$0]  %s323, 4096, %s325, %s311, 512, 256, 16
        $region28: #{tpu_custom_call.1} parent=15 // pred_fallthru
          _
        // Predicated region
        $region29: #{tpu_custom_call.1} parent=15 // pred_check
          %p331 = pneg %p142
        $region30: #{tpu_custom_call.1} parent=15 // pred_check_branch
          %333 = sbr.rel (%p331) target = $region32
        $region31: #{tpu_custom_call.1} parent=15 // pred_region
          %s334 = sand.u32 %s28, 1
          %s335 = scalar_lea.sflag [#allocation11], %s334
          %s336 = sand.u32 %s132, 1
          %s337 = smul.addr %s336, 256
          %s338 = scalar_lea.vmem [#allocation10], %s337
          %s339 = smul.u32 16, %s36
          %s340 = smul.u32 4, %s35
          %s342 = ssub.s32 4096, 4096
          %343 = vsyncadd %s335, %s342
          %s344 = smul.addr %s339, 8
          %s345 = sadd.s32 %s340, %s344
          %s346 = smul.addr %s345, 64
          %s347 = scalar_lea.hbm %s3, %s346
          %s348 = sshll.u32 %s338, 4
          %s349 = int_to_ptr.vmem [resolvable:$true] %s348
          %354 = dma.hbm_to_vmem [thread:$0]  %s347, 4096, %s349, %s335, 512, 256, 16
        $region32: #{tpu_custom_call.1} parent=15 // pred_fallthru
          _
        // Predicated region
        $region33: #{tpu_custom_call.1} parent=15 // pred_check
          %p355 = pneg %p168
        $region34: #{tpu_custom_call.1} parent=15 // pred_check_branch
          %357 = sbr.rel (%p355) target = $region36
        $region35: #{tpu_custom_call.1} parent=15 // pred_region
          %s358 = sand.u32 %s28, 1
          %s359 = scalar_lea.sflag [#allocation11], %s358
          %s360 = sand.u32 %s158, 1
          %s361 = smul.addr %s360, 4
          %s362 = scalar_lea.vmem [#allocation12], %s361
          %s363 = smul.u32 4, %s35
          %s365 = ssub.s32 64, 64
          %366 = vsyncadd %s359, %s365
          %s367 = smul.addr %s363, 16
          %s368 = scalar_lea.hbm %s4, %s367
          %s370 = sshll.u32 %s362, 4
          %s371 = int_to_ptr.vmem [resolvable:$true] %s370
          %373 = dma.hbm_to_vmem [thread:$0]  %s368, 64, %s371, %s359
        $region36: #{tpu_custom_call.1} parent=15 // pred_fallthru
          _
        // Predicated region
        $region37: #{tpu_custom_call.1} parent=15 // pred_check
          %p374 = pneg %p194
        $region38: #{tpu_custom_call.1} parent=15 // pred_check_branch
          %376 = sbr.rel (%p374) target = $region40
        $region39: #{tpu_custom_call.1} parent=15 // pred_region
          %s377 = sand.u32 %s184, 1
          %s378 = scalar_lea.sflag [#allocation14], %s377
          %s379 = sand.u32 %s184, 1
          %s380 = smul.addr %s379, 4
          %s381 = scalar_lea.vmem [#allocation13], %s380
          %s382 = smul.u32 4, %s35
          %s384 = ssub.s32 64, 64
          %385 = vsyncadd %s378, %s384
          %s386 = smul.addr %s382, 16
          %s387 = scalar_lea.hbm %s5, %s386
          %s389 = sshll.u32 %s381, 4
          %s390 = int_to_ptr.vmem [resolvable:$true] %s389
          %392 = dma.hbm_to_vmem [thread:$0]  %s387, 64, %s390, %s378
        $region40: #{tpu_custom_call.1} parent=15 // pred_fallthru
          _
        // Predicated region
        $region41: #{tpu_custom_call.1} parent=15 // pred_check
          %p393 = pneg %p220
        $region42: #{tpu_custom_call.1} parent=15 // pred_check_branch
          %395 = sbr.rel (%p393) target = $region44
        $region43: #{tpu_custom_call.1} parent=15 // pred_region
          %p396 = scmp.lt.s32.totalorder %s35, 1
          %s397 = scalar_select %p396, %s35, 1
          %s398 = smul.addr %s397, 8
          %s399 = scalar_lea.vmem %s6, %s398
        $region44: #{tpu_custom_call.1} parent=15 // pred_fallthru
          _
      $region16: #{tpu_custom_call.1} parent=5 // pred_fallthru
        _
      %p400 = scmp.le.s32.totalorder 1, %s28
      %p401 = scmp.lt.s32.totalorder %s28, 5
      %p402 = pnand %p400, %p401
      %p403 = pneg %p402
      // Predicated region
      $region45: #{tpu_custom_call.1} parent=5 // pred_check
        _
      $region46: #{tpu_custom_call.1} parent=5 // pred_check_branch
        %405 = sbr.rel (%p402) target = $region48
      $region47: #{tpu_custom_call.1} parent=5 // pred_region
        %s406 = ssub.s32 %s28, 1
        %s407 = sand.u32 %s53, 1
        %s408 = scalar_lea.sflag [#allocation5], %s407
        %s409 = sand.u32 %s53, 1
        %s410 = smul.addr %s409, 4
        %s411 = scalar_lea.vmem [#allocation4], %s410
        // Predicated region
        $region49: #{tpu_custom_call.1} parent=47 // pred_check
          %p412 = pneg %p66
        $region50: #{tpu_custom_call.1} parent=47 // pred_check_branch
          %414 = sbr.rel (%p412) target = $region52
        $region51: #{tpu_custom_call.1} parent=47 // pred_region
          %415 = dma.done %s408, 64
        $region52: #{tpu_custom_call.1} parent=47 // pred_fallthru
          _
        %s416 = sand.u32 %s33, 1
        %s417 = scalar_lea.sflag [#allocation8], %s416
        %s418 = sand.u32 %s79, 1
        %s419 = smul.addr %s418, 4
        %s420 = scalar_lea.vmem [#allocation7], %s419
        // Predicated region
        $region53: #{tpu_custom_call.1} parent=47 // pred_check
          %p421 = pneg %p92
        $region54: #{tpu_custom_call.1} parent=47 // pred_check_branch
          %423 = sbr.rel (%p421) target = $region56
        $region55: #{tpu_custom_call.1} parent=47 // pred_region
          %424 = dma.done %s417, 64
        $region56: #{tpu_custom_call.1} parent=47 // pred_fallthru
          _
        %s425 = sand.u32 %s33, 1
        %s426 = scalar_lea.sflag [#allocation8], %s425
        %s427 = sand.u32 %s107, 1
        %s428 = smul.addr %s427, 256
        %s429 = scalar_lea.vmem [#allocation9], %s428
        // Predicated region
        $region57: #{tpu_custom_call.1} parent=47 // pred_check
          %p430 = pneg %p120
        $region58: #{tpu_custom_call.1} parent=47 // pred_check_branch
          %432 = sbr.rel (%p430) target = $region60
        $region59: #{tpu_custom_call.1} parent=47 // pred_region
          %433 = dma.done %s426, 4096
        $region60: #{tpu_custom_call.1} parent=47 // pred_fallthru
          _
        %s434 = sand.u32 %s33, 1
        %s435 = scalar_lea.sflag [#allocation11], %s434
        %s436 = sand.u32 %s135, 1
        %s437 = smul.addr %s436, 256
        %s438 = scalar_lea.vmem [#allocation10], %s437
        // Predicated region
        $region61: #{tpu_custom_call.1} parent=47 // pred_check
          %p439 = pneg %p148
        $region62: #{tpu_custom_call.1} parent=47 // pred_check_branch
          %441 = sbr.rel (%p439) target = $region64
        $region63: #{tpu_custom_call.1} parent=47 // pred_region
          %442 = dma.done %s435, 4096
        $region64: #{tpu_custom_call.1} parent=47 // pred_fallthru
          _
        %s443 = sand.u32 %s33, 1
        %s444 = scalar_lea.sflag [#allocation11], %s443
        %s445 = sand.u32 %s161, 1
        %s446 = smul.addr %s445, 4
        %s447 = scalar_lea.vmem [#allocation12], %s446
        // Predicated region
        $region65: #{tpu_custom_call.1} parent=47 // pred_check
          %p448 = pneg %p174
        $region66: #{tpu_custom_call.1} parent=47 // pred_check_branch
          %450 = sbr.rel (%p448) target = $region68
        $region67: #{tpu_custom_call.1} parent=47 // pred_region
          %451 = dma.done %s444, 64
        $region68: #{tpu_custom_call.1} parent=47 // pred_fallthru
          _
        %s452 = sand.u32 %s187, 1
        %s453 = scalar_lea.sflag [#allocation14], %s452
        %s454 = sand.u32 %s187, 1
        %s455 = smul.addr %s454, 4
        %s456 = scalar_lea.vmem [#allocation13], %s455
        // Predicated region
        $region69: #{tpu_custom_call.1} parent=47 // pred_check
          %p457 = pneg %p200
        $region70: #{tpu_custom_call.1} parent=47 // pred_check_branch
          %459 = sbr.rel (%p457) target = $region72
        $region71: #{tpu_custom_call.1} parent=47 // pred_region
          %460 = dma.done %s453, 64
        $region72: #{tpu_custom_call.1} parent=47 // pred_fallthru
          _
        %s461 = sand.u32 %s53, 1
        %s462 = scalar_lea.sflag [#allocation5], %s461
        %s463 = sand.u32 %s53, 1
        %s464 = smul.addr %s463, 4
        %s465 = scalar_lea.vmem [#allocation4], %s464
        %p466 = pneg %p66
        %p467 = pneg %p63
        %s468 = sand.u32 %s33, 1
        %s469 = scalar_lea.sflag [#allocation8], %s468
        %s470 = sand.u32 %s79, 1
        %s471 = smul.addr %s470, 4
        %s472 = scalar_lea.vmem [#allocation7], %s471
        %p473 = pneg %p92
        %p474 = pneg %p89
        %s475 = sand.u32 %s33, 1
        %s476 = scalar_lea.sflag [#allocation8], %s475
        %s477 = sand.u32 %s107, 1
        %s478 = smul.addr %s477, 256
        %s479 = scalar_lea.vmem [#allocation9], %s478
        %p480 = pneg %p120
        %p481 = pneg %p117
        %s482 = sand.u32 %s33, 1
        %s483 = scalar_lea.sflag [#allocation11], %s482
        %s484 = sand.u32 %s135, 1
        %s485 = smul.addr %s484, 256
        %s486 = scalar_lea.vmem [#allocation10], %s485
        %p487 = pneg %p148
        %p488 = pneg %p145
        %s489 = sand.u32 %s33, 1
        %s490 = scalar_lea.sflag [#allocation11], %s489
        %s491 = sand.u32 %s161, 1
        %s492 = smul.addr %s491, 4
        %s493 = scalar_lea.vmem [#allocation12], %s492
        %p494 = pneg %p174
        %p495 = pneg %p171
        %s496 = sand.u32 %s187, 1
        %s497 = scalar_lea.sflag [#allocation14], %s496
        %s498 = sand.u32 %s187, 1
        %s499 = smul.addr %s498, 4
        %s500 = scalar_lea.vmem [#allocation13], %s499
        %p501 = pneg %p200
        %p502 = pneg %p197
        %p503 = scmp.lt.s32.totalorder %s37, 1
        %s504 = scalar_select %p503, %s37, 1
        %s505 = smul.addr %s504, 8
        %s506 = scalar_lea.vmem %s6, %s505
        %p507 = pneg %p226
        %p508 = pneg %p223
        %p509 = pneg %p252
        %p510 = pneg %p249
        %s511 = sand.u32 %s239, 1
        %s512 = scalar_lea.sflag [#allocation6], %s511
        %s513 = sand.u32 %s239, 1
        %s514 = smul.addr %s513, 8
        %s515 = scalar_lea.vmem [#allocation15], %s514
        %s516 = smul.u32 16, %s38
        %s517 = smul.u32 4, %s37
        %s518 = smul.u32 16, %s38
        %s519 = smul.u32 4, %s37
        %s520 = smul.u32 4, %s37
        %s521 = smul.u32 4, %s37
        %p522 = scmp.lt.s32.totalorder %s37, 1
        %s523 = scalar_select %p522, %s37, 1
        %s524 = smul.addr %s523, 8
        %s525 = scalar_lea.vmem %s6, %s524
        %p527 = scmp.eq.s32.totalorder %s38, 0
        // Predicated region
        $region73: #{tpu_custom_call.1} parent=47 // pred_check
          %p528 = pneg %p527
        $region74: #{tpu_custom_call.1} parent=47 // pred_check_branch
          %530 = sbr.rel (%p528) target = $region76
        $region75: #{tpu_custom_call.1} parent=47 // pred_region
          %531 = vst [vmem:[#allocation2] sm:$0xff] 0.0
          %532 = vst [vmem:[#allocation2 + $0x8] sm:$0xff] 0.0
          %533 = vst [vmem:[#allocation2 + $0x10] sm:$0xff] 0.0
          %534 = vst [vmem:[#allocation2 + $0x18] sm:$0xff] 0.0
          %535 = vst [vmem:[#allocation3] sm:$0xff] 0.0
          %536 = vst [vmem:[#allocation3 + $0x8] sm:$0xff] 0.0
          %537 = vst [vmem:[#allocation3 + $0x10] sm:$0xff] 0.0
          %538 = vst [vmem:[#allocation3 + $0x18] sm:$0xff] 0.0
        $region76: #{tpu_custom_call.1} parent=47 // pred_fallthru
          _
        %v539 = vld [vmem:[#allocation2] sm:$0xff]
        %v540 = vld [vmem:[#allocation2 + $0x8] sm:$0xff]
        %v541 = vld [vmem:[#allocation2 + $0x10] sm:$0xff]
        %v542 = vld [vmem:[#allocation2 + $0x18] sm:$0xff]
        %v543 = vld [vmem:[%s411] sm:$0xf]
        %v544 = vld [vmem:[%s429] sm:$0xff]
        %v545 = vld [vmem:[%s429 + $0x8] sm:$0xff]
        %v546 = vld [vmem:[%s429 + $0x10] sm:$0xff]
        %v547 = vld [vmem:[%s429 + $0x18] sm:$0xff]
        %v548 = vld [vmem:[%s429 + $0x20] sm:$0xff]
        %v549 = vld [vmem:[%s429 + $0x28] sm:$0xff]
        %v550 = vld [vmem:[%s429 + $0x30] sm:$0xff]
        %v551 = vld [vmem:[%s429 + $0x38] sm:$0xff]
        %v552 = vld [vmem:[%s429 + $0x40] sm:$0xff]
        %v553 = vld [vmem:[%s429 + $0x48] sm:$0xff]
        %v554 = vld [vmem:[%s429 + $0x50] sm:$0xff]
        %v555 = vld [vmem:[%s429 + $0x58] sm:$0xff]
        %v556 = vld [vmem:[%s429 + $0x60] sm:$0xff]
        %v557 = vld [vmem:[%s429 + $0x68] sm:$0xff]
        %v558 = vld [vmem:[%s429 + $0x70] sm:$0xff]
        %v559 = vld [vmem:[%s429 + $0x78] sm:$0xff]
        %v560 = vld [vmem:[%s429 + $0x80] sm:$0xff]
        %v561 = vld [vmem:[%s429 + $0x88] sm:$0xff]
        %v562 = vld [vmem:[%s429 + $0x90] sm:$0xff]
        %v563 = vld [vmem:[%s429 + $0x98] sm:$0xff]
        %v564 = vld [vmem:[%s429 + $0xa0] sm:$0xff]
        %v565 = vld [vmem:[%s429 + $0xa8] sm:$0xff]
        %v566 = vld [vmem:[%s429 + $0xb0] sm:$0xff]
        %v567 = vld [vmem:[%s429 + $0xb8] sm:$0xff]
        %v568 = vld [vmem:[%s429 + $0xc0] sm:$0xff]
        %v569 = vld [vmem:[%s429 + $0xc8] sm:$0xff]
        %v570 = vld [vmem:[%s429 + $0xd0] sm:$0xff]
        %v571 = vld [vmem:[%s429 + $0xd8] sm:$0xff]
        %v572 = vld [vmem:[%s429 + $0xe0] sm:$0xff]
        %v573 = vld [vmem:[%s429 + $0xe8] sm:$0xff]
        %v574 = vld [vmem:[%s429 + $0xf0] sm:$0xff]
        %v575 = vld [vmem:[%s429 + $0xf8] sm:$0xff]
        %v608 = vunpack.c.l.b16 %v544
        %v609 = vunpack.c.h.b16 %v544
        %v610 = vunpack.c.l.b16 %v545
        %v611 = vunpack.c.h.b16 %v545
        %v612 = vunpack.c.l.b16 %v546
        %v613 = vunpack.c.h.b16 %v546
        %v614 = vunpack.c.l.b16 %v547
        %v615 = vunpack.c.h.b16 %v547
        %v616 = vunpack.c.l.b16 %v548
        %v617 = vunpack.c.h.b16 %v548
        %v618 = vunpack.c.l.b16 %v549
        %v619 = vunpack.c.h.b16 %v549
        %v620 = vunpack.c.l.b16 %v550
        %v621 = vunpack.c.h.b16 %v550
        %v622 = vunpack.c.l.b16 %v551
        %v623 = vunpack.c.h.b16 %v551
        %v624 = vunpack.c.l.b16 %v552
        %v625 = vunpack.c.h.b16 %v552
        %v626 = vunpack.c.l.b16 %v553
        %v627 = vunpack.c.h.b16 %v553
        %v628 = vunpack.c.l.b16 %v554
        %v629 = vunpack.c.h.b16 %v554
        %v630 = vunpack.c.l.b16 %v555
        %v631 = vunpack.c.h.b16 %v555
        %v632 = vunpack.c.l.b16 %v556
        %v633 = vunpack.c.h.b16 %v556
        %v634 = vunpack.c.l.b16 %v557
        %v635 = vunpack.c.h.b16 %v557
        %v636 = vunpack.c.l.b16 %v558
        %v637 = vunpack.c.h.b16 %v558
        %v638 = vunpack.c.l.b16 %v559
        %v639 = vunpack.c.h.b16 %v559
        %v640 = vunpack.c.l.b16 %v560
        %v641 = vunpack.c.h.b16 %v560
        %v642 = vunpack.c.l.b16 %v561
        %v643 = vunpack.c.h.b16 %v561
        %v644 = vunpack.c.l.b16 %v562
        %v645 = vunpack.c.h.b16 %v562
        %v646 = vunpack.c.l.b16 %v563
        %v647 = vunpack.c.h.b16 %v563
        %v648 = vunpack.c.l.b16 %v564
        %v649 = vunpack.c.h.b16 %v564
        %v650 = vunpack.c.l.b16 %v565
        %v651 = vunpack.c.h.b16 %v565
        %v652 = vunpack.c.l.b16 %v566
        %v653 = vunpack.c.h.b16 %v566
        %v654 = vunpack.c.l.b16 %v567
        %v655 = vunpack.c.h.b16 %v567
        %v656 = vunpack.c.l.b16 %v568
        %v657 = vunpack.c.h.b16 %v568
        %v658 = vunpack.c.l.b16 %v569
        %v659 = vunpack.c.h.b16 %v569
        %v660 = vunpack.c.l.b16 %v570
        %v661 = vunpack.c.h.b16 %v570
        %v662 = vunpack.c.l.b16 %v571
        %v663 = vunpack.c.h.b16 %v571
        %v664 = vunpack.c.l.b16 %v572
        %v665 = vunpack.c.h.b16 %v572
        %v666 = vunpack.c.l.b16 %v573
        %v667 = vunpack.c.h.b16 %v573
        %v668 = vunpack.c.l.b16 %v574
        %v669 = vunpack.c.h.b16 %v574
        %v670 = vunpack.c.l.b16 %v575
        %v671 = vunpack.c.h.b16 %v575
        %v672 = vpack.c.b16 %v612, %v608
        %v673 = vpack.c.b16 %v613, %v609
        %v674 = vpack.c.b16 %v614, %v610
        %v675 = vpack.c.b16 %v615, %v611
        %v676 = vpack.c.b16 %v620, %v616
        %v677 = vpack.c.b16 %v621, %v617
        %v678 = vpack.c.b16 %v622, %v618
        %v679 = vpack.c.b16 %v623, %v619
        %v680 = vpack.c.b16 %v628, %v624
        %v681 = vpack.c.b16 %v629, %v625
        %v682 = vpack.c.b16 %v630, %v626
        %v683 = vpack.c.b16 %v631, %v627
        %v684 = vpack.c.b16 %v636, %v632
        %v685 = vpack.c.b16 %v637, %v633
        %v686 = vpack.c.b16 %v638, %v634
        %v687 = vpack.c.b16 %v639, %v635
        %v688 = vpack.c.b16 %v644, %v640
        %v689 = vpack.c.b16 %v645, %v641
        %v690 = vpack.c.b16 %v646, %v642
        %v691 = vpack.c.b16 %v647, %v643
        %v692 = vpack.c.b16 %v652, %v648
        %v693 = vpack.c.b16 %v653, %v649
        %v694 = vpack.c.b16 %v654, %v650
        %v695 = vpack.c.b16 %v655, %v651
        %v696 = vpack.c.b16 %v660, %v656
        %v697 = vpack.c.b16 %v661, %v657
        %v698 = vpack.c.b16 %v662, %v658
        %v699 = vpack.c.b16 %v663, %v659
        %v700 = vpack.c.b16 %v668, %v664
        %v701 = vpack.c.b16 %v669, %v665
        %v702 = vpack.c.b16 %v670, %v666
        %v703 = vpack.c.b16 %v671, %v667
        %736 = vmatprep.subr.bf16.mxu0 %v673
        %737 = vmatpush1.bf16.msra.mxu0 %v672
        %738 = vmatprep.subr.bf16.mxu0 %v677
        %739 = vmatpush1.bf16.msra.mxu0 %v676
        %740 = vmatprep.subr.bf16.mxu0 %v681
        %741 = vmatpush1.bf16.msra.mxu0 %v680
        %742 = vmatprep.subr.bf16.mxu0 %v685
        %743 = vmatpush1.bf16.msra.mxu0 %v684
        %744 = vmatprep.subr.bf16.mxu0 %v689
        %745 = vmatpush1.bf16.msra.mxu0 %v688
        %746 = vmatprep.subr.bf16.mxu0 %v693
        %747 = vmatpush1.bf16.msra.mxu0 %v692
        %748 = vmatprep.subr.bf16.mxu0 %v697
        %749 = vmatpush1.bf16.msra.mxu0 %v696
        %750 = vmatprep.subr.bf16.mxu0 %v701
        %751 = vmatpush1.bf16.msra.mxu0 %v700
        %752 = vmatprep.subr.bf16.mxu0 0
        %753 = vmatpush1.bf16.msra.mxu0 0
        %754 = vmatprep.subr.bf16.mxu0 0
        %755 = vmatpush1.bf16.msra.mxu0 0
        %756 = vmatprep.subr.bf16.mxu0 0
        %757 = vmatpush1.bf16.msra.mxu0 0
        %758 = vmatprep.subr.bf16.mxu0 0
        %759 = vmatpush1.bf16.msra.mxu0 0
        %760 = vmatprep.subr.bf16.mxu0 0
        %761 = vmatpush1.bf16.msra.mxu0 0
        %762 = vmatprep.subr.bf16.mxu0 0
        %763 = vmatpush1.bf16.msra.mxu0 0
        %764 = vmatprep.subr.bf16.mxu0 0
        %765 = vmatpush1.bf16.msra.mxu0 0
        %766 = vmatprep.subr.bf16.mxu0 0
        %767 = vmatpush1.bf16.msra.mxu0 0
        %768 = vmatprep.mubr.bf16.mxu0 0
        %769 = vmatmul.mubr.bf16.gmra.mrb[0].mxu0 %v543
        %v770 = vpop.f32.mrb[0].mxu0
        %v771 = vadd.f32 0.0, %v770
        %v772 = vpop.f32.mrb[0].mxu0
        %v773 = vadd.f32 0.0, %v772
        %v774 = vpop.f32.mrb[0].mxu0
        %v775 = vpop.f32.mrb[0].mxu0
        %776 = vdwg.mxu0
        %777 = vmatprep.subr.bf16.mxu0 %v675
        %778 = vmatpush1.bf16.msra.mxu0 %v674
        %779 = vmatprep.subr.bf16.mxu0 %v679
        %780 = vmatpush1.bf16.msra.mxu0 %v678
        %781 = vmatprep.subr.bf16.mxu0 %v683
        %782 = vmatpush1.bf16.msra.mxu0 %v682
        %783 = vmatprep.subr.bf16.mxu0 %v687
        %784 = vmatpush1.bf16.msra.mxu0 %v686
        %785 = vmatprep.subr.bf16.mxu0 %v691
        %786 = vmatpush1.bf16.msra.mxu0 %v690
        %787 = vmatprep.subr.bf16.mxu0 %v695
        %788 = vmatpush1.bf16.msra.mxu0 %v694
        %789 = vmatprep.subr.bf16.mxu0 %v699
        %790 = vmatpush1.bf16.msra.mxu0 %v698
        %791 = vmatprep.subr.bf16.mxu0 %v703
        %792 = vmatpush1.bf16.msra.mxu0 %v702
        %793 = vmatprep.subr.bf16.mxu0 0
        %794 = vmatpush1.bf16.msra.mxu0 0
        %795 = vmatprep.subr.bf16.mxu0 0
        %796 = vmatpush1.bf16.msra.mxu0 0
        %797 = vmatprep.subr.bf16.mxu0 0
        %798 = vmatpush1.bf16.msra.mxu0 0
        %799 = vmatprep.subr.bf16.mxu0 0
        %800 = vmatpush1.bf16.msra.mxu0 0
        %801 = vmatprep.subr.bf16.mxu0 0
        %802 = vmatpush1.bf16.msra.mxu0 0
        %803 = vmatprep.subr.bf16.mxu0 0
        %804 = vmatpush1.bf16.msra.mxu0 0
        %805 = vmatprep.subr.bf16.mxu0 0
        %806 = vmatpush1.bf16.msra.mxu0 0
        %807 = vmatprep.subr.bf16.mxu0 0
        %808 = vmatpush1.bf16.msra.mxu0 0
        %809 = vmatprep.mubr.bf16.mxu0 0
        %810 = vmatmul.mubr.bf16.gmra.mrb[0].mxu0 %v543
        %v811 = vpop.f32.mrb[0].mxu0
        %v812 = vadd.f32 0.0, %v811
        %v813 = vpop.f32.mrb[0].mxu0
        %v814 = vadd.f32 0.0, %v813
        %v815 = vpop.f32.mrb[0].mxu0
        %v816 = vpop.f32.mrb[0].mxu0
        %817 = vdwg.mxu0
        %v818 = vadd.f32 %v539, %v771
        %v819 = vadd.f32 %v540, %v773
        %v820 = vadd.f32 %v541, %v812
        %v821 = vadd.f32 %v542, %v814
        %822 = vst [vmem:[#allocation2] sm:$0xff] %v818
        %823 = vst [vmem:[#allocation2 + $0x8] sm:$0xff] %v819
        %824 = vst [vmem:[#allocation2 + $0x10] sm:$0xff] %v820
        %825 = vst [vmem:[#allocation2 + $0x18] sm:$0xff] %v821
        %v826 = vld [vmem:[#allocation3] sm:$0xff]
        %v827 = vld [vmem:[#allocation3 + $0x8] sm:$0xff]
        %v828 = vld [vmem:[#allocation3 + $0x10] sm:$0xff]
        %v829 = vld [vmem:[#allocation3 + $0x18] sm:$0xff]
        %v830 = vld [vmem:[%s420] sm:$0xf]
        %v831 = vld [vmem:[%s438] sm:$0xff]
        %v832 = vld [vmem:[%s438 + $0x8] sm:$0xff]
        %v833 = vld [vmem:[%s438 + $0x10] sm:$0xff]
        %v834 = vld [vmem:[%s438 + $0x18] sm:$0xff]
        %v835 = vld [vmem:[%s438 + $0x20] sm:$0xff]
        %v836 = vld [vmem:[%s438 + $0x28] sm:$0xff]
        %v837 = vld [vmem:[%s438 + $0x30] sm:$0xff]
        %v838 = vld [vmem:[%s438 + $0x38] sm:$0xff]
        %v839 = vld [vmem:[%s438 + $0x40] sm:$0xff]
        %v840 = vld [vmem:[%s438 + $0x48] sm:$0xff]
        %v841 = vld [vmem:[%s438 + $0x50] sm:$0xff]
        %v842 = vld [vmem:[%s438 + $0x58] sm:$0xff]
        %v843 = vld [vmem:[%s438 + $0x60] sm:$0xff]
        %v844 = vld [vmem:[%s438 + $0x68] sm:$0xff]
        %v845 = vld [vmem:[%s438 + $0x70] sm:$0xff]
        %v846 = vld [vmem:[%s438 + $0x78] sm:$0xff]
        %v847 = vld [vmem:[%s438 + $0x80] sm:$0xff]
        %v848 = vld [vmem:[%s438 + $0x88] sm:$0xff]
        %v849 = vld [vmem:[%s438 + $0x90] sm:$0xff]
        %v850 = vld [vmem:[%s438 + $0x98] sm:$0xff]
        %v851 = vld [vmem:[%s438 + $0xa0] sm:$0xff]
        %v852 = vld [vmem:[%s438 + $0xa8] sm:$0xff]
        %v853 = vld [vmem:[%s438 + $0xb0] sm:$0xff]
        %v854 = vld [vmem:[%s438 + $0xb8] sm:$0xff]
        %v855 = vld [vmem:[%s438 + $0xc0] sm:$0xff]
        %v856 = vld [vmem:[%s438 + $0xc8] sm:$0xff]
        %v857 = vld [vmem:[%s438 + $0xd0] sm:$0xff]
        %v858 = vld [vmem:[%s438 + $0xd8] sm:$0xff]
        %v859 = vld [vmem:[%s438 + $0xe0] sm:$0xff]
        %v860 = vld [vmem:[%s438 + $0xe8] sm:$0xff]
        %v861 = vld [vmem:[%s438 + $0xf0] sm:$0xff]
        %v862 = vld [vmem:[%s438 + $0xf8] sm:$0xff]
        %v895 = vunpack.c.l.b16 %v831
        %v896 = vunpack.c.h.b16 %v831
        %v897 = vunpack.c.l.b16 %v832
        %v898 = vunpack.c.h.b16 %v832
        %v899 = vunpack.c.l.b16 %v833
        %v900 = vunpack.c.h.b16 %v833
        %v901 = vunpack.c.l.b16 %v834
        %v902 = vunpack.c.h.b16 %v834
        %v903 = vunpack.c.l.b16 %v835
        %v904 = vunpack.c.h.b16 %v835
        %v905 = vunpack.c.l.b16 %v836
        %v906 = vunpack.c.h.b16 %v836
        %v907 = vunpack.c.l.b16 %v837
        %v908 = vunpack.c.h.b16 %v837
        %v909 = vunpack.c.l.b16 %v838
        %v910 = vunpack.c.h.b16 %v838
        %v911 = vunpack.c.l.b16 %v839
        %v912 = vunpack.c.h.b16 %v839
        %v913 = vunpack.c.l.b16 %v840
        %v914 = vunpack.c.h.b16 %v840
        %v915 = vunpack.c.l.b16 %v841
        %v916 = vunpack.c.h.b16 %v841
        %v917 = vunpack.c.l.b16 %v842
        %v918 = vunpack.c.h.b16 %v842
        %v919 = vunpack.c.l.b16 %v843
        %v920 = vunpack.c.h.b16 %v843
        %v921 = vunpack.c.l.b16 %v844
        %v922 = vunpack.c.h.b16 %v844
        %v923 = vunpack.c.l.b16 %v845
        %v924 = vunpack.c.h.b16 %v845
        %v925 = vunpack.c.l.b16 %v846
        %v926 = vunpack.c.h.b16 %v846
        %v927 = vunpack.c.l.b16 %v847
        %v928 = vunpack.c.h.b16 %v847
        %v929 = vunpack.c.l.b16 %v848
        %v930 = vunpack.c.h.b16 %v848
        %v931 = vunpack.c.l.b16 %v849
        %v932 = vunpack.c.h.b16 %v849
        %v933 = vunpack.c.l.b16 %v850
        %v934 = vunpack.c.h.b16 %v850
        %v935 = vunpack.c.l.b16 %v851
        %v936 = vunpack.c.h.b16 %v851
        %v937 = vunpack.c.l.b16 %v852
        %v938 = vunpack.c.h.b16 %v852
        %v939 = vunpack.c.l.b16 %v853
        %v940 = vunpack.c.h.b16 %v853
        %v941 = vunpack.c.l.b16 %v854
        %v942 = vunpack.c.h.b16 %v854
        %v943 = vunpack.c.l.b16 %v855
        %v944 = vunpack.c.h.b16 %v855
        %v945 = vunpack.c.l.b16 %v856
        %v946 = vunpack.c.h.b16 %v856
        %v947 = vunpack.c.l.b16 %v857
        %v948 = vunpack.c.h.b16 %v857
        %v949 = vunpack.c.l.b16 %v858
        %v950 = vunpack.c.h.b16 %v858
        %v951 = vunpack.c.l.b16 %v859
        %v952 = vunpack.c.h.b16 %v859
        %v953 = vunpack.c.l.b16 %v860
        %v954 = vunpack.c.h.b16 %v860
        %v955 = vunpack.c.l.b16 %v861
        %v956 = vunpack.c.h.b16 %v861
        %v957 = vunpack.c.l.b16 %v862
        %v958 = vunpack.c.h.b16 %v862
        %v959 = vpack.c.b16 %v899, %v895
        %v960 = vpack.c.b16 %v900, %v896
        %v961 = vpack.c.b16 %v901, %v897
        %v962 = vpack.c.b16 %v902, %v898
        %v963 = vpack.c.b16 %v907, %v903
        %v964 = vpack.c.b16 %v908, %v904
        %v965 = vpack.c.b16 %v909, %v905
        %v966 = vpack.c.b16 %v910, %v906
        %v967 = vpack.c.b16 %v915, %v911
        %v968 = vpack.c.b16 %v916, %v912
        %v969 = vpack.c.b16 %v917, %v913
        %v970 = vpack.c.b16 %v918, %v914
        %v971 = vpack.c.b16 %v923, %v919
        %v972 = vpack.c.b16 %v924, %v920
        %v973 = vpack.c.b16 %v925, %v921
        %v974 = vpack.c.b16 %v926, %v922
        %v975 = vpack.c.b16 %v931, %v927
        %v976 = vpack.c.b16 %v932, %v928
        %v977 = vpack.c.b16 %v933, %v929
        %v978 = vpack.c.b16 %v934, %v930
        %v979 = vpack.c.b16 %v939, %v935
        %v980 = vpack.c.b16 %v940, %v936
        %v981 = vpack.c.b16 %v941, %v937
        %v982 = vpack.c.b16 %v942, %v938
        %v983 = vpack.c.b16 %v947, %v943
        %v984 = vpack.c.b16 %v948, %v944
        %v985 = vpack.c.b16 %v949, %v945
        %v986 = vpack.c.b16 %v950, %v946
        %v987 = vpack.c.b16 %v955, %v951
        %v988 = vpack.c.b16 %v956, %v952
        %v989 = vpack.c.b16 %v957, %v953
        %v990 = vpack.c.b16 %v958, %v954
        %1023 = vmatprep.subr.bf16.mxu0 %v960
        %1024 = vmatpush1.bf16.msra.mxu0 %v959
        %1025 = vmatprep.subr.bf16.mxu0 %v964
        %1026 = vmatpush1.bf16.msra.mxu0 %v963
        %1027 = vmatprep.subr.bf16.mxu0 %v968
        %1028 = vmatpush1.bf16.msra.mxu0 %v967
        %1029 = vmatprep.subr.bf16.mxu0 %v972
        %1030 = vmatpush1.bf16.msra.mxu0 %v971
        %1031 = vmatprep.subr.bf16.mxu0 %v976
        %1032 = vmatpush1.bf16.msra.mxu0 %v975
        %1033 = vmatprep.subr.bf16.mxu0 %v980
        %1034 = vmatpush1.bf16.msra.mxu0 %v979
        %1035 = vmatprep.subr.bf16.mxu0 %v984
        %1036 = vmatpush1.bf16.msra.mxu0 %v983
        %1037 = vmatprep.subr.bf16.mxu0 %v988
        %1038 = vmatpush1.bf16.msra.mxu0 %v987
        %1039 = vmatprep.subr.bf16.mxu0 0
        %1040 = vmatpush1.bf16.msra.mxu0 0
        %1041 = vmatprep.subr.bf16.mxu0 0
        %1042 = vmatpush1.bf16.msra.mxu0 0
        %1043 = vmatprep.subr.bf16.mxu0 0
        %1044 = vmatpush1.bf16.msra.mxu0 0
        %1045 = vmatprep.subr.bf16.mxu0 0
        %1046 = vmatpush1.bf16.msra.mxu0 0
        %1047 = vmatprep.subr.bf16.mxu0 0
        %1048 = vmatpush1.bf16.msra.mxu0 0
        %1049 = vmatprep.subr.bf16.mxu0 0
        %1050 = vmatpush1.bf16.msra.mxu0 0
        %1051 = vmatprep.subr.bf16.mxu0 0
        %1052 = vmatpush1.bf16.msra.mxu0 0
        %1053 = vmatprep.subr.bf16.mxu0 0
        %1054 = vmatpush1.bf16.msra.mxu0 0
        %1055 = vmatprep.mubr.bf16.mxu0 0
        %1056 = vmatmul.mubr.bf16.gmra.mrb[0].mxu0 %v830
        %v1057 = vpop.f32.mrb[0].mxu0
        %v1058 = vadd.f32 0.0, %v1057
        %v1059 = vpop.f32.mrb[0].mxu0
        %v1060 = vadd.f32 0.0, %v1059
        %v1061 = vpop.f32.mrb[0].mxu0
        %v1062 = vpop.f32.mrb[0].mxu0
        %1063 = vdwg.mxu0
        %1064 = vmatprep.subr.bf16.mxu0 %v962
        %1065 = vmatpush1.bf16.msra.mxu0 %v961
        %1066 = vmatprep.subr.bf16.mxu0 %v966
        %1067 = vmatpush1.bf16.msra.mxu0 %v965
        %1068 = vmatprep.subr.bf16.mxu0 %v970
        %1069 = vmatpush1.bf16.msra.mxu0 %v969
        %1070 = vmatprep.subr.bf16.mxu0 %v974
        %1071 = vmatpush1.bf16.msra.mxu0 %v973
        %1072 = vmatprep.subr.bf16.mxu0 %v978
        %1073 = vmatpush1.bf16.msra.mxu0 %v977
        %1074 = vmatprep.subr.bf16.mxu0 %v982
        %1075 = vmatpush1.bf16.msra.mxu0 %v981
        %1076 = vmatprep.subr.bf16.mxu0 %v986
        %1077 = vmatpush1.bf16.msra.mxu0 %v985
        %1078 = vmatprep.subr.bf16.mxu0 %v990
        %1079 = vmatpush1.bf16.msra.mxu0 %v989
        %1080 = vmatprep.subr.bf16.mxu0 0
        %1081 = vmatpush1.bf16.msra.mxu0 0
        %1082 = vmatprep.subr.bf16.mxu0 0
        %1083 = vmatpush1.bf16.msra.mxu0 0
        %1084 = vmatprep.subr.bf16.mxu0 0
        %1085 = vmatpush1.bf16.msra.mxu0 0
        %1086 = vmatprep.subr.bf16.mxu0 0
        %1087 = vmatpush1.bf16.msra.mxu0 0
        %1088 = vmatprep.subr.bf16.mxu0 0
        %1089 = vmatpush1.bf16.msra.mxu0 0
        %1090 = vmatprep.subr.bf16.mxu0 0
        %1091 = vmatpush1.bf16.msra.mxu0 0
        %1092 = vmatprep.subr.bf16.mxu0 0
        %1093 = vmatpush1.bf16.msra.mxu0 0
        %1094 = vmatprep.subr.bf16.mxu0 0
        %1095 = vmatpush1.bf16.msra.mxu0 0
        %1096 = vmatprep.mubr.bf16.mxu0 0
        %1097 = vmatmul.mubr.bf16.gmra.mrb[0].mxu0 %v830
        %v1098 = vpop.f32.mrb[0].mxu0
        %v1099 = vadd.f32 0.0, %v1098
        %v1100 = vpop.f32.mrb[0].mxu0
        %v1101 = vadd.f32 0.0, %v1100
        %v1102 = vpop.f32.mrb[0].mxu0
        %v1103 = vpop.f32.mrb[0].mxu0
        %1104 = vdwg.mxu0
        %v1105 = vadd.f32 %v826, %v1058
        %v1106 = vadd.f32 %v827, %v1060
        %v1107 = vadd.f32 %v828, %v1099
        %v1108 = vadd.f32 %v829, %v1101
        %1109 = vst [vmem:[#allocation3] sm:$0xff] %v1105
        %1110 = vst [vmem:[#allocation3 + $0x8] sm:$0xff] %v1106
        %1111 = vst [vmem:[#allocation3 + $0x10] sm:$0xff] %v1107
        %1112 = vst [vmem:[#allocation3 + $0x18] sm:$0xff] %v1108
        %p1113 = scmp.eq.s32.totalorder %s38, 1
        // Predicated region
        $region77: #{tpu_custom_call.1} parent=47 // pred_check
          %p1114 = pneg %p1113
        $region78: #{tpu_custom_call.1} parent=47 // pred_check_branch
          %1116 = sbr.rel (%p1114) target = $region80
        $region79: #{tpu_custom_call.1} parent=47 // pred_region
          %v1117 = vld [vmem:[#allocation2] sm:$0xff]
          %v1118 = vld [vmem:[#allocation2 + $0x8] sm:$0xff]
          %v1119 = vld [vmem:[#allocation2 + $0x10] sm:$0xff]
          %v1120 = vld [vmem:[#allocation2 + $0x18] sm:$0xff]
          %v1121 = vld [vmem:[%s447] sm:$0xf]
          %v1123 = vlaneseq
          %v1124 = vshrl.u32 %v1123, 7
          %v1125 = vsub.s32 0, %v1124
          %v1126 = vrot.slane %v1121, %v1125
          %v1127 = vlaneseq
          %v1128 = vshrl.u32 %v1127, 7
          %v1129 = vsub.s32 1, %v1128
          %v1130 = vrot.slane %v1121, %v1129
          %v1131 = vlaneseq
          %v1132 = vshrl.u32 %v1131, 7
          %v1133 = vsub.s32 2, %v1132
          %v1134 = vrot.slane %v1121, %v1133
          %v1135 = vlaneseq
          %v1136 = vshrl.u32 %v1135, 7
          %v1137 = vsub.s32 3, %v1136
          %v1138 = vrot.slane %v1121, %v1137
          %v1143 = vadd.f32 %v1117, %v1126
          %v1144 = vadd.f32 %v1118, %v1130
          %v1145 = vadd.f32 %v1119, %v1134
          %v1146 = vadd.f32 %v1120, %v1138
          %v1147 = vld [vmem:[#allocation3] sm:$0xff]
          %v1148 = vld [vmem:[#allocation3 + $0x8] sm:$0xff]
          %v1149 = vld [vmem:[#allocation3 + $0x10] sm:$0xff]
          %v1150 = vld [vmem:[#allocation3 + $0x18] sm:$0xff]
          %v1151 = vld [vmem:[%s456] sm:$0xf]
          %v1153 = vlaneseq
          %v1154 = vshrl.u32 %v1153, 7
          %v1155 = vsub.s32 0, %v1154
          %v1156 = vrot.slane %v1151, %v1155
          %v1157 = vlaneseq
          %v1158 = vshrl.u32 %v1157, 7
          %v1159 = vsub.s32 1, %v1158
          %v1160 = vrot.slane %v1151, %v1159
          %v1161 = vlaneseq
          %v1162 = vshrl.u32 %v1161, 7
          %v1163 = vsub.s32 2, %v1162
          %v1164 = vrot.slane %v1151, %v1163
          %v1165 = vlaneseq
          %v1166 = vshrl.u32 %v1165, 7
          %v1167 = vsub.s32 3, %v1166
          %v1168 = vrot.slane %v1151, %v1167
          %v1173 = vadd.f32 %v1147, %v1156
          %v1174 = vadd.f32 %v1148, %v1160
          %v1175 = vadd.f32 %v1149, %v1164
          %v1176 = vadd.f32 %v1150, %v1168
          %v1177 = vadd.f32 %v1143, %v1173
          %v1178 = vxor.u32 %v1177, 2147483648
          %v1179 = vmul.f32 %v1178, 1.442695
          %v1180 = vpow.pop %v1179
          %v1181 = vadd.f32 %v1180, 1.0
          %v1182 = vrcp.pop %v1181
          %v1183 = vmul.f32 1.0, %v1182
          %v1184 = vadd.f32 %v1144, %v1174
          %v1185 = vxor.u32 %v1184, 2147483648
          %v1186 = vmul.f32 %v1185, 1.442695
          %v1187 = vpow.pop %v1186
          %v1188 = vadd.f32 %v1187, 1.0
          %v1189 = vrcp.pop %v1188
          %v1190 = vmul.f32 1.0, %v1189
          %v1191 = vadd.f32 %v1145, %v1175
          %v1192 = vxor.u32 %v1191, 2147483648
          %v1193 = vmul.f32 %v1192, 1.442695
          %v1194 = vpow.pop %v1193
          %v1195 = vadd.f32 %v1194, 1.0
          %v1196 = vrcp.pop %v1195
          %v1197 = vmul.f32 1.0, %v1196
          %v1198 = vmul.f32 %v1190, %v1146
          %v1199 = vmul.f32 %v1183, %v1176
          %v1200 = vadd.f32 %v1198, %v1199
          %v1201 = vtanh.pop %v1200
          %v1202 = vld [vmem:[%s525] sm:$0xff]
          %v1203 = vsub.f32 1.0, %v1197
          %v1204 = vmul.f32 %v1203, %v1201
          %v1205 = vmul.f32 %v1197, %v1202
          %v1206 = vadd.f32 %v1204, %v1205
          %1207 = vst [vmem:[%s515] sm:$0xff] %v1206
        $region80: #{tpu_custom_call.1} parent=47 // pred_fallthru
          _
        %s1208 = sand.u32 %s239, 1
        %s1209 = scalar_lea.sflag [#allocation6], %s1208
        %s1210 = sand.u32 %s239, 1
        %s1211 = smul.addr %s1210, 8
        %s1212 = scalar_lea.vmem [#allocation15], %s1211
        // Predicated region
        $region81: #{tpu_custom_call.1} parent=47 // pred_check
          %p1213 = pneg %p249
        $region82: #{tpu_custom_call.1} parent=47 // pred_check_branch
          %1215 = sbr.rel (%p1213) target = $region84
        $region83: #{tpu_custom_call.1} parent=47 // pred_region
          %s1217 = ssub.s32 128, 128
          %1218 = vsyncadd %s1209, %s1217
          %s1219 = smul.addr %s37, 128
          %s1220 = scalar_lea.hbm %s7, %s1219
          %s1222 = sshll.u32 %s1212, 4
          %s1223 = int_to_ptr.vmem [resolvable:$true] %s1222
          %1225 = dma.vmem_to_hbm [thread:$0]  %s1223, 128, %s1220, %s1209
        $region84: #{tpu_custom_call.1} parent=47 // pred_fallthru
          _
      $region48: #{tpu_custom_call.1} parent=5 // pred_fallthru
        _
      %p1226 = scmp.le.s32.totalorder 2, %s28
      // Predicated region
      $region85: #{tpu_custom_call.1} parent=5 // pred_check
        %p1227 = pneg %p1226
      $region86: #{tpu_custom_call.1} parent=5 // pred_check_branch
        %1229 = sbr.rel (%p1227) target = $region88
      $region87: #{tpu_custom_call.1} parent=5 // pred_region
        %s1230 = ssub.s32 %s28, 2
        // Predicated region
        $region89: #{tpu_custom_call.1} parent=87 // pred_check
          %p1231 = pneg %p255
        $region90: #{tpu_custom_call.1} parent=87 // pred_check_branch
          %1233 = sbr.rel (%p1231) target = $region92
        $region91: #{tpu_custom_call.1} parent=87 // pred_region
          %s1234 = sand.u32 %s240, 1
          %s1235 = scalar_lea.sflag [#allocation6], %s1234
          %s1236 = sand.u32 %s240, 1
          %s1237 = smul.addr %s1236, 8
          %s1238 = scalar_lea.vmem [#allocation15], %s1237
          %1239 = dma.done %s1235, 128
        $region92: #{tpu_custom_call.1} parent=87 // pred_fallthru
          _
      $region88: #{tpu_custom_call.1} parent=5 // pred_fallthru
        _
    $region6: #{tpu_custom_call.1} parent=1 // loop_footer
      %s32 = sadd.s32 1, %s28
    $region7: #{tpu_custom_call.1} parent=1 // loop_footer_branch
      %27 = sbr.rel target = $region3
    $region8: #{tpu_custom_call.1} parent=1 // loop_exit
      _
    %1240 = vsyncpa [#allocation5], 1
    %s1241 = scalar_lea.sflag [#allocation5], 1
    %1242 = vsyncpa %s1241, 1
    %1243 = vsyncpa [#allocation8], 1
    %s1244 = scalar_lea.sflag [#allocation8], 1
    %1245 = vsyncpa %s1244, 1
    %1246 = vsyncpa [#allocation11], 1
    %s1247 = scalar_lea.sflag [#allocation11], 1
    %1248 = vsyncpa %s1247, 1
    %1249 = vsyncpa [#allocation14], 1
    %s1250 = scalar_lea.sflag [#allocation14], 1
    %1251 = vsyncpa %s1250, 1
    %1252 = vsyncpa [#allocation6], 1
    %s1253 = scalar_lea.sflag [#allocation6], 1
    %1254 = vsyncpa %s1253, 1

</llo_original>
